<compile_context>
chip_gen: v7x
topology: tpu7x:2x2x1
jax: 0.10.0
libtpu: 0.0.40
codegen_flags: <defaults>
</compile_context>

<pallas_src>
import math

import jax
import jax.numpy as jnp
from jax.experimental import pallas as pl
from jax.experimental.pallas import tpu as pltpu

_LANE = 128      # lane width (last dim)
_SUBLANE = 8     # sublane width (second-to-last dim)


def _round_up(x, m):
    return ((x + m - 1) // m) * m


# ----------------------------- Pallas kernels ------------------------------ #

def _matmul_kernel(a_ref, z_ref, o_ref):
    # Single VMEM-resident tile: (M, K) @ (K, F) -> (M, F) on the MXU.
    o_ref[...] = jnp.dot(
        a_ref[...], z_ref[...], preferred_element_type=jnp.float32
    ).astype(o_ref.dtype)


def _batched_matmul_kernel(a_ref, z_ref, o_ref):
    # a_ref: (M, K) resident across the batch grid; z/o blocks: (1, K, F)/(1, M, F).
    o_ref[0] = jnp.dot(
        a_ref[...], z_ref[0], preferred_element_type=jnp.float32
    ).astype(o_ref.dtype)


# ----------------------------- Pallas wrappers ------------------------------ #

def pallas_matmul(a: jax.Array, z: jax.Array) -> jax.Array:
    """A(M,K) @ Z(K,F), lane-dense padded, whole arrays resident in VMEM."""
    M, K = a.shape
    K2, F = z.shape
    assert K == K2, (a.shape, z.shape)
    out_dtype = z.dtype

    Mp = _round_up(M, _SUBLANE)
    Kp = _round_up(K, _SUBLANE)
    Fp = _round_up(F, _LANE)          # lane-dense output: unmasked vst

    a_p = jnp.pad(a.astype(jnp.float32), ((0, Mp - M), (0, Kp - K)))
    z_p = jnp.pad(z.astype(jnp.float32), ((0, Kp - K), (0, Fp - F)))

    itemsize = jnp.dtype(out_dtype).itemsize
    out = pl.pallas_call(
        _matmul_kernel,
        out_shape=jax.ShapeDtypeStruct((Mp, Fp), out_dtype),
        in_specs=[
            pl.BlockSpec(memory_space=pltpu.MemorySpace.VMEM),
            pl.BlockSpec(memory_space=pltpu.MemorySpace.VMEM),
        ],
        out_specs=pl.BlockSpec(memory_space=pltpu.MemorySpace.VMEM),
        cost_estimate=pl.CostEstimate(
            flops=2 * Mp * Kp * Fp,
            transcendentals=0,
            bytes_accessed=4 * (Mp * Kp + Kp * Fp) + itemsize * Mp * Fp,
        ),
    )(a_p, z_p)
    return out[:M, :F]


def pallas_batched_matmul(a: jax.Array, z: jax.Array) -> jax.Array:
    """A(M,K) @ Z(B,K,F) -> (B,M,F) in ONE pallas_call, grid over the batch."""
    M, K = a.shape
    B, K2, F = z.shape
    assert K == K2, (a.shape, z.shape)
    out_dtype = z.dtype

    Mp = _round_up(M, _SUBLANE)
    Kp = _round_up(K, _SUBLANE)
    Fp = _round_up(F, _LANE)

    a_p = jnp.pad(a.astype(jnp.float32), ((0, Mp - M), (0, Kp - K)))
    z_p = jnp.pad(z.astype(jnp.float32), ((0, 0), (0, Kp - K), (0, Fp - F)))

    itemsize = jnp.dtype(out_dtype).itemsize
    out = pl.pallas_call(
        _batched_matmul_kernel,
        out_shape=jax.ShapeDtypeStruct((B, Mp, Fp), out_dtype),
        grid=(B,),
        in_specs=[
            # Weight block index is constant across the grid -> stays in VMEM.
            pl.BlockSpec((Mp, Kp), lambda b: (0, 0)),
            pl.BlockSpec((1, Kp, Fp), lambda b: (b, 0, 0)),
        ],
        out_specs=pl.BlockSpec((1, Mp, Fp), lambda b: (b, 0, 0)),
        compiler_params=pltpu.CompilerParams(
            dimension_semantics=("parallel",)   # v7x: split batch across 2 TCs
        ),
        cost_estimate=pl.CostEstimate(
            flops=2 * B * Mp * Kp * Fp,
            transcendentals=0,
            bytes_accessed=4 * (Mp * Kp + B * Kp * Fp) + itemsize * B * Mp * Fp,
        ),
    )(a_p, z_p)
    return out[:, :M, :F]


# ------------------------------- IOArch port -------------------------------- #

class IOArchPallas:
    """JAX/Pallas port of IOArch.forward (arch_X / arch_Y treated as identity)."""

    METHODS = ("fill", "linear", "graph", "transpose", "nothing", "selection",
               "common")

    def __init__(self, Nin, Nout, hid_dim, idxs, method, C=None, *, key=None):
        assert method in self.METHODS, "Not a valid method chosen"
        self.Nin = Nin
        self.Nout = Nout
        self.idxs = idxs
        self.method = method

        if method == "transpose":
            self.X_out_dim = Nout
            self.Y_in_dim = Nin
        else:
            self.X_out_dim = hid_dim
            self.Y_in_dim = hid_dim

        if method == "linear":
            # torch.nn.init.kaiming_uniform_ (a=0, fan_in=Nin):
            #   bound = sqrt(2) * sqrt(3 / fan_in) = sqrt(6 / fan_in)
            assert key is not None
            bound = math.sqrt(6.0 / Nin)
            self.linear_transform = jax.random.uniform(
                key, (Nout, Nin), dtype=jnp.float32, minval=-bound, maxval=bound
            )

        if method == "selection":
            assert C is not None
            self.C = jnp.asarray(C, dtype=jnp.float32)

        # Whole forward is jitted: gather / scatter / pad glue fuses with the
        # pallas_call into one XLA program (one dispatch per call).
        self._forward = jax.jit(self._forward_impl)

    def __call__(self, graph1_adj, graph2_adj, feat):
        return self._forward(graph1_adj, graph2_adj, feat)

    def _forward_impl(self, graph1_adj, graph2_adj, feat):
        # arch_X.n_layers == 0 branch of the reference forward.
        Z = feat

        if self.method == "fill":
            Zy = jnp.ones((self.Nout, Z.shape[1]), dtype=Z.dtype)
            Zy = Zy.at[self.idxs].set(Z)
        elif self.method == "linear":
            Zy = pallas_matmul(self.linear_transform, Z)
        elif self.method == "graph":
            adj = jnp.asarray(graph2_adj, dtype=jnp.float32)
            adj_sel = adj[:, self.idxs]            # column gather (fused under jit)
            Zy = pallas_matmul(adj_sel, Z)         # hot path in Pallas
        elif self.method == "transpose":
            if Z.ndim > 2:
                Zy = jnp.transpose(Z, (0, 2, 1))
            else:
                Zy = Z.T
        elif self.method == "nothing":
            Zy = Z
        elif self.method == "selection":
            if Z.ndim == 3:
                Zy = pallas_batched_matmul(self.C, Z)   # single grid=(B,) launch
            else:
                Zy = pallas_matmul(self.C, Z)
        elif self.method == "common":
            Zy = jnp.zeros((self.Nout, Z.shape[1]), dtype=Z.dtype)
            Zy = Zy.at[self.idxs[1], :].set(Z[self.idxs[0], :])

        # arch_Y treated as identity (see TODO above).
        return Zy


# ---------------------------------- main ------------------------------------ #

if __name__ == "__main__":
    key = jax.random.PRNGKey(0)
    k_feat, k_w, k_adj, k_C, k_feat3 = jax.random.split(key, 5)

    Nin, Nout, hid_dim, B = 16, 24, 32, 2

    feat = jax.random.normal(k_feat, (Nin, hid_dim), dtype=jnp.float32)
    feat3 = jax.random.normal(k_feat3, (B, Nin, hid_dim), dtype=jnp.float32)

    # graph2 adjacency (Nout x Nout), symmetric 0/1 matrix.
    a = (jax.random.uniform(k_adj, (Nout, Nout)) > 0.7).astype(jnp.float32)
    graph2_adj = jnp.maximum(a, a.T)
    graph1_adj = jnp.eye(Nin, dtype=jnp.float32)   # unused (arch_X identity)

    idxs = jnp.arange(Nin, dtype=jnp.int32)        # maps Nin rows into Nout rows
    idxs_common = (jnp.arange(Nin, dtype=jnp.int32),
                   jnp.arange(Nin, dtype=jnp.int32) + (Nout - Nin))
    C = jax.random.normal(k_C, (Nout, Nin), dtype=jnp.float32)

    results = {}

    # 'linear' : Pallas matmul with kaiming-uniform parameter.
    mod_linear = IOArchPallas(Nin, Nout, hid_dim, idxs, "linear", key=k_w)
    results["linear"] = mod_linear(graph1_adj, graph2_adj, feat)

    # 'graph' : adjacency column-gather + Pallas matmul (fused under jit).
    mod = IOArchPallas(Nin, Nout, hid_dim, idxs, "graph")
    results["graph"] = mod(graph1_adj, graph2_adj, feat)

    # 'selection' : C @ Z via Pallas matmul (2-D and batched 3-D paths).
    mod_sel = IOArchPallas(Nin, Nout, hid_dim, idxs, "selection", C=C)
    results["selection_2d"] = mod_sel(graph1_adj, graph2_adj, feat)
    results["selection_3d"] = mod_sel(graph1_adj, graph2_adj, feat3)

    # 'fill', 'common', 'transpose', 'nothing' : index / layout glue.
    mod = IOArchPallas(Nin, Nout, hid_dim, idxs, "fill")
    results["fill"] = mod(graph1_adj, graph2_adj, feat)
    mod = IOArchPallas(Nin, Nout, hid_dim, idxs_common, "common")
    results["common"] = mod(graph1_adj, graph2_adj, feat)
    mod = IOArchPallas(Nin, Nout, hid_dim, idxs, "transpose")
    results["transpose"] = mod(graph1_adj, graph2_adj, feat)
    mod = IOArchPallas(Nin, Nout, hid_dim, idxs, "nothing")
    results["nothing"] = mod(graph1_adj, graph2_adj, feat)

    for v in results.values():
        jax.block_until_ready(v)

    # ------------------------- correctness checks --------------------------- #
    ref = {
        "linear": mod_linear.linear_transform @ feat,
        "graph": graph2_adj[:, idxs] @ feat,
        "selection_2d": C @ feat,
        "selection_3d": jnp.einsum("mk,bkf->bmf", C, feat3),
        "fill": jnp.ones((Nout, hid_dim), jnp.float32).at[idxs].set(feat),
        "common": jnp.zeros((Nout, hid_dim), jnp.float32)
                    .at[idxs_common[1], :].set(feat[idxs_common[0], :]),
        "transpose": feat.T,
        "nothing": feat,
    }
    for name, r in ref.items():
        assert results[name].shape == r.shape, (name, results[name].shape, r.shape)
        assert jnp.allclose(results[name], r, atol=1e-5), name

    print("KERNEL_OK")
</pallas_src>

<mosaic_0001>
module attributes {stable_mosaic.version = 11 : i64} {
  func.func @_matmul_kernel(%arg0: memref<24x16xf32, #tpu.memory_space<vmem>>, %arg1: memref<16x128xf32, #tpu.memory_space<vmem>>, %arg2: memref<24x128xf32, #tpu.memory_space<vmem>>) attributes {dimension_semantics = [], scalar_prefetch = 0 : i64, scratch_operands = 0 : i64, tpu.core_type = #tpu.core_type<tc>} {
    %c0 = arith.constant 0 : index
    %c0_0 = arith.constant 0 : index
    %0 = vector.load %arg0[%c0, %c0_0] : memref<24x16xf32, #tpu.memory_space<vmem>>, vector<24x16xf32>
    %c0_1 = arith.constant 0 : index
    %c0_2 = arith.constant 0 : index
    %1 = vector.load %arg1[%c0_1, %c0_2] : memref<16x128xf32, #tpu.memory_space<vmem>>, vector<16x128xf32>
    %cst = arith.constant dense<0.000000e+00> : vector<24x128xf32>
    %2 = tpu.matmul %0, %1, %cst {dimension_numbers = #tpu.dot_dimension_numbers<[1], [0], [0], [1], [0, 0, 1, 1], [], []>} : vector<24x16xf32>, vector<16x128xf32>, vector<24x128xf32> -> vector<24x128xf32>
    %c0_3 = arith.constant 0 : index
    %c0_4 = arith.constant 0 : index
    %3 = vector.load %arg2[%c0_3, %c0_4] : memref<24x128xf32, #tpu.memory_space<vmem>>, vector<24x128xf32>
    tpu.vector_store %arg2[%c0_3, %c0_4], %2 {strides = array<i32>} : memref<24x128xf32, #tpu.memory_space<vmem>>, vector<24x128xf32>,
    return
  }
}

</mosaic_0001>

<llo_original>
// kernel: _forward_impl.1
$region0: #{_forward_impl.1}
  #allocation0 [shape = 'u32[]', space=smem, size = 0x4, offset = 0x4, fixed_abs, tag = 'smem constant byte address 0x4 - core index']
  #allocation1 [shape = 'u32[144,128]{1,0:T(1,128)}', space=vmem, size = 0x12000, scoped, tag = 'internal scratch']
  %s0 = inlined_call_operand.vmem [shape: f32[24,16], index: 0, kind: input, shape index: {}]
  %s1 = inlined_call_operand.vmem [shape: f32[16,128], index: 1, kind: input, shape index: {}]
  %s2 = inlined_call_operand.hbm [shape: f32[24,128], index: 2, kind: output, shape index: {}]
  %s3 = sld [smem:[#allocation0]]
  $region18: #{_forward_impl.1} parent=0
    _
  %s5 = ssub.s32 1, %s3
  %s6 = scalar_select 0, %s5, %s3
  $region1: #{_forward_impl.1} parent=0
    #allocation2 [shape = 'u8[12288]{0}', space=vmem, size = 0x3000, scoped, tag = 'output window, operand 0, single buffered']
    #allocation3 [shape = 's32[1]{0}', space=sflag, size = 0x4, scoped, tag = 'scoped memory for _forward_impl.1']
    %7 = vsyncpa [#allocation3], 0
    // Predicated region
    $region2: #{_forward_impl.1} parent=1 // pred_check
      _
    $region3: #{_forward_impl.1} parent=1 // pred_check_branch
      %9 = sbr.rel (0) target = $region5
    $region4: #{_forward_impl.1} parent=1 // pred_region
      _
    $region5: #{_forward_impl.1} parent=1 // pred_fallthru
      _
    // Predicated region
    $region6: #{_forward_impl.1} parent=1 // pred_check
      _
    $region7: #{_forward_impl.1} parent=1 // pred_check_branch
      %11 = sbr.rel (0) target = $region9
    $region8: #{_forward_impl.1} parent=1 // pred_region
      _
    $region9: #{_forward_impl.1} parent=1 // pred_fallthru
      _
    %v12 = vld [vmem:[%s0] sm:$0xff]
    %v13 = vld [vmem:[%s0 + $0x8] sm:$0xff]
    %v14 = vld [vmem:[%s0 + $0x10] sm:$0xff]
    %v15 = vld [vmem:[%s1] sm:$0xff]
    %v16 = vld [vmem:[%s1 + $0x8] sm:$0xff]
    %vm17 = vcmask 130048
    %v19 = vsel %vm17, %v12, 0
    %v22 = vsel %vm17, %v13, 0
    %v25 = vsel %vm17, %v14, 0
    %27 = vmatprep.subr.mxu0 0.0
    %28 = vmatpush1.msra.mxu0 %v15
    %29 = vmatprep.subr.mxu0 0.0
    %30 = vmatpush1.msra.mxu0 %v16
    %31 = vmatprep.subr.mxu0 0.0
    %32 = vmatpush1.msra.mxu0 0.0
    %33 = vmatprep.subr.mxu0 0.0
    %34 = vmatpush1.msra.mxu0 0.0
    %35 = vmatprep.subr.mxu0 0.0
    %36 = vmatpush1.msra.mxu0 0.0
    %37 = vmatprep.subr.mxu0 0.0
    %38 = vmatpush1.msra.mxu0 0.0
    %39 = vmatprep.subr.mxu0 0.0
    %40 = vmatpush1.msra.mxu0 0.0
    %41 = vmatprep.subr.mxu0 0.0
    %42 = vmatpush1.msra.mxu0 0.0
    %43 = vmatprep.subr.mxu0 0.0
    %44 = vmatpush1.msra.mxu0 0.0
    %45 = vmatprep.subr.mxu0 0.0
    %46 = vmatpush1.msra.mxu0 0.0
    %47 = vmatprep.subr.mxu0 0.0
    %48 = vmatpush1.msra.mxu0 0.0
    %49 = vmatprep.subr.mxu0 0.0
    %50 = vmatpush1.msra.mxu0 0.0
    %51 = vmatprep.subr.mxu0 0.0
    %52 = vmatpush1.msra.mxu0 0.0
    %53 = vmatprep.subr.mxu0 0.0
    %54 = vmatpush1.msra.mxu0 0.0
    %55 = vmatprep.subr.mxu0 0.0
    %56 = vmatpush1.msra.mxu0 0.0
    %57 = vmatprep.subr.mxu0 0.0
    %58 = vmatpush1.msra.mxu0 0.0
    %59 = vmatprep.subr.mxu0 0.0
    %60 = vmatpush1.msra.mxu0 0.0
    %61 = vmatprep.subr.mxu0 0.0
    %62 = vmatpush1.msra.mxu0 0.0
    %63 = vmatprep.subr.mxu0 0.0
    %64 = vmatpush1.msra.mxu0 0.0
    %65 = vmatprep.subr.mxu0 0.0
    %66 = vmatpush1.msra.mxu0 0.0
    %67 = vmatprep.subr.mxu0 0.0
    %68 = vmatpush1.msra.mxu0 0.0
    %69 = vmatprep.subr.mxu0 0.0
    %70 = vmatpush1.msra.mxu0 0.0
    %71 = vmatprep.subr.mxu0 0.0
    %72 = vmatpush1.msra.mxu0 0.0
    %73 = vmatprep.subr.mxu0 0.0
    %74 = vmatpush1.msra.mxu0 0.0
    %75 = vmatprep.subr.mxu0 0.0
    %76 = vmatpush1.msra.mxu0 0.0
    %77 = vmatprep.subr.mxu0 0.0
    %78 = vmatpush1.msra.mxu0 0.0
    %79 = vmatprep.subr.mxu0 0.0
    %80 = vmatpush1.msra.mxu0 0.0
    %81 = vmatprep.subr.mxu0 0.0
    %82 = vmatpush1.msra.mxu0 0.0
    %83 = vmatprep.subr.mxu0 0.0
    %84 = vmatpush1.msra.mxu0 0.0
    %85 = vmatprep.subr.mxu0 0.0
    %86 = vmatpush1.msra.mxu0 0.0
    %87 = vmatprep.subr.mxu0 0.0
    %88 = vmatpush1.msra.mxu0 0.0
    %89 = vmatprep.subr.mxu0 0.0
    %90 = vmatpush1.msra.mxu0 0.0
    %91 = vmatprep.mubr.f32.mxu0 0.0
    %92 = vmatmul.mubr.f32.gmra.mrb[0].mxu0 %v19
    %v93 = vpop.f32.mrb[0].mxu0
    %v94 = vadd.f32 0.0, %v93
    %v95 = vpop.f32.mrb[0].mxu0
    %96 = vmatprep.mubr.f32.mxu0 0.0
    %97 = vmatmul.mubr.f32.gmra.mrb[0].mxu0 %v22
    %v98 = vpop.f32.mrb[0].mxu0
    %v99 = vadd.f32 0.0, %v98
    %v100 = vpop.f32.mrb[0].mxu0
    %101 = vmatprep.mubr.f32.mxu0 0.0
    %102 = vmatmul.mubr.f32.gmra.mrb[0].mxu0 %v25
    %v103 = vpop.f32.mrb[0].mxu0
    %v104 = vadd.f32 0.0, %v103
    %v105 = vpop.f32.mrb[0].mxu0
    %106 = vdwg.mxu0
    %107 = vst [vmem:[#allocation2] sm:$0xff] %v94
    %108 = vst [vmem:[#allocation2 + $0x8] sm:$0xff] %v99
    %109 = vst [vmem:[#allocation2 + $0x10] sm:$0xff] %v104
    // Predicated region
    $region10: #{_forward_impl.1} parent=1 // pred_check
      _
    $region11: #{_forward_impl.1} parent=1 // pred_check_branch
      %111 = sbr.rel (0) target = $region13
    $region12: #{_forward_impl.1} parent=1 // pred_region
      %s113 = ssub.s32 384, 384
      %114 = vsyncadd [#allocation3], %s113
      %s115 = sshll.u32 [#allocation2], 4
      %s116 = int_to_ptr.vmem [resolvable:$true] %s115
      %121 = dma.vmem_to_hbm [thread:$0]  %s116, 384, %s2, [#allocation3], 128, 128, 8
    $region13: #{_forward_impl.1} parent=1 // pred_fallthru
      _
    // Predicated region
    $region14: #{_forward_impl.1} parent=1 // pred_check
      _
    $region15: #{_forward_impl.1} parent=1 // pred_check_branch
      %123 = sbr.rel (0) target = $region17
    $region16: #{_forward_impl.1} parent=1 // pred_region
      %124 = dma.done [#allocation3], 384
    $region17: #{_forward_impl.1} parent=1 // pred_fallthru
      _
    %125 = vsyncpa [#allocation3], 1

</llo_original>
